<compile_context>
chip_gen: v5e
topology: v5e:2x2
jax: 0.10.0
libtpu: 0.0.40
codegen_flags: <defaults>
</compile_context>

<pallas_src>
from math import gcd

import jax
import jax.numpy as jnp
from jax.experimental import pallas as pl
from jax.experimental.pallas import tpu as pltpu

SEQ_LEN = 20          # fixed by BatchNorm1d(20) in the module
_TARGET_ROWS = 640    # aim for ~512-640 original rows per grid step


def _lcm(a, b):
    return a * b // gcd(a, b)


def _round_up(a, b):
    return ((a + b - 1) // b) * b


def _pick_pack_factor(E, H, O, budget_bytes=4 << 20):
    """Largest row-pack factor P whose kron(I_P, W) weights stay small."""
    for P in (8, 4, 2, 1):
        if P * P * (E * H + H * O) * 4 <= budget_bytes:
            return P
    return 1


def _fused_kernel(xp_ref, w1_ref, b1_ref, scale_ref, shift_ref, w2_ref, b2_ref,
                  o_ref):
    # xp_ref:    (TM/P, P*E)  P row-packed input rows (lane-dense)
    # w1_ref:    (P*E, P*H)   block-diag kron(I_P, W1^T)      (VMEM resident)
    # b1_ref:    (1, P*H)
    # scale_ref: (TM/P, P*H)  per-row BN scale, row-packed    (VMEM resident)
    # shift_ref: (TM/P, P*H)  per-row BN shift, row-packed    (VMEM resident)
    # w2_ref:    (P*H, P*O)   block-diag kron(I_P, W2^T)      (VMEM resident)
    # b2_ref:    (1, P*O)
    # o_ref:     (TM/P, P*O)  row-packed output (lane-dense)
    xp = xp_ref[...]

    # Linear1 (+ dropout == identity in eval mode); f32 accumulation on MXU.
    h = jnp.dot(xp, w1_ref[...], preferred_element_type=jnp.float32)
    h = h + b1_ref[...]

    # ReLU, then BatchNorm1d(20) in eval mode folded to a per-row affine.
    # Elementwise math stays in f32 (v5e VPU has no bf16).
    h = jnp.maximum(h, 0.0)
    h = h * scale_ref[...] + shift_ref[...]

    # Linear2 (+ dropout == identity in eval mode).
    h = h.astype(w2_ref.dtype)
    y = jnp.dot(h, w2_ref[...], preferred_element_type=jnp.float32)
    y = y + b2_ref[...]

    o_ref[...] = y.astype(o_ref.dtype)


def self_attention_forward_net_aligned(x, params, *, matmul_dtype=None):
    """x: (B, 20, E) float32.  params: dict of eval-mode module parameters.

    matmul_dtype: optional (e.g. jnp.bfloat16) dtype for the matmul inputs;
    accumulation, ReLU and BatchNorm stay in float32.
    """
    B, L, E = x.shape
    assert L == SEQ_LEN, f"BatchNorm1d({SEQ_LEN}) requires seq dim == {SEQ_LEN}"
    H = params["w1"].shape[0]     # linear1.weight: (H, E)
    O = params["w2"].shape[0]     # linear2.weight: (O, H)
    eps = 1e-5
    out_dtype = x.dtype
    w_dtype = jnp.dtype(matmul_dtype) if matmul_dtype is not None else jnp.dtype(jnp.float32)

    # ---- fold BN running stats into per-channel scale / shift --------------
    inv_std = 1.0 / jnp.sqrt(params["bn_var"].astype(jnp.float32) + eps)       # (L,)
    scale_l = params["bn_w"].astype(jnp.float32) * inv_std                     # (L,)
    shift_l = (params["bn_b"].astype(jnp.float32)
               - params["bn_mean"].astype(jnp.float32) * scale_l)              # (L,)

    # ---- choose row packing / tiling ---------------------------------------
    P = _pick_pack_factor(E, H, O)   # 8 for this module's small E/H/O
    LP = _lcm(L, P)                  # per-row BN pattern period (original rows)
    T0 = _lcm(LP, 8 * P)             # minimal multi-block tile (sublane rule)
    M = B * L
    if M <= T0:
        tile_m = _round_up(M, LP)    # single grid step for small batches
    else:
        per = max(1, min(_TARGET_ROWS // T0, -(-M // T0)))
        tile_m = T0 * per
    M_pad = _round_up(M, tile_m)

    # ---- wrapper-side data prep (free reshapes + one-time XLA work) --------
    x2 = x.reshape(M, E).astype(jnp.float32)
    if M_pad != M:
        x2 = jnp.pad(x2, ((0, M_pad - M), (0, 0)))
    xp = x2.reshape(M_pad // P, P * E).astype(w_dtype)          # row-major pack

    eye_p = jnp.eye(P, dtype=jnp.float32)
    w1p = jnp.kron(eye_p, params["w1"].T.astype(jnp.float32)).astype(w_dtype)   # (P*E, P*H)
    w2p = jnp.kron(eye_p, params["w2"].T.astype(jnp.float32)).astype(w_dtype)   # (P*H, P*O)
    b1p = jnp.tile(params["b1"].astype(jnp.float32).reshape(1, H), (1, P))      # (1, P*H)
    b2p = jnp.tile(params["b2"].astype(jnp.float32).reshape(1, O), (1, P))      # (1, P*O)

    # Packed per-row BN scale/shift: pattern has period q = LP // P packed
    # rows, and tile_m is a multiple of LP, so one tiled block is correct for
    # every grid step (grid-invariant -> loaded into VMEM once).
    q = LP // P
    scale_rows = scale_l[jnp.arange(LP) % L]                    # (LP,)
    shift_rows = shift_l[jnp.arange(LP) % L]
    scale_blk = jnp.tile(jnp.repeat(scale_rows, H).reshape(q, P * H),
                         (tile_m // LP, 1))                     # (tile_m//P, P*H)
    shift_blk = jnp.tile(jnp.repeat(shift_rows, H).reshape(q, P * H),
                         (tile_m // LP, 1))

    args = (xp, w1p, b1p, scale_blk, shift_blk, w2p, b2p)
    out_elems = (M_pad // P) * (P * O)
    bytes_accessed = int(sum(int(a.size) * a.dtype.itemsize for a in args)
                         + out_elems * jnp.dtype(out_dtype).itemsize)

    out_packed = pl.pallas_call(
        _fused_kernel,
        out_shape=jax.ShapeDtypeStruct((M_pad // P, P * O), out_dtype),
        grid_spec=pltpu.PrefetchScalarGridSpec(
            num_scalar_prefetch=0,
            grid=(M_pad // tile_m,),
            in_specs=[
                pl.BlockSpec((tile_m // P, P * E), lambda i: (i, 0)),   # xp tile
                pl.BlockSpec((P * E, P * H), lambda i: (0, 0)),         # W1 packed (resident)
                pl.BlockSpec((1, P * H), lambda i: (0, 0)),             # b1 packed
                pl.BlockSpec((tile_m // P, P * H), lambda i: (0, 0)),   # BN scale (resident)
                pl.BlockSpec((tile_m // P, P * H), lambda i: (0, 0)),   # BN shift (resident)
                pl.BlockSpec((P * H, P * O), lambda i: (0, 0)),         # W2 packed (resident)
                pl.BlockSpec((1, P * O), lambda i: (0, 0)),             # b2 packed
            ],
            out_specs=pl.BlockSpec((tile_m // P, P * O), lambda i: (i, 0)),
        ),
        compiler_params=pltpu.CompilerParams(
            dimension_semantics=("parallel",)),
        cost_estimate=pl.CostEstimate(
            flops=2 * M_pad * (E * H + H * O),
            transcendentals=0,
            bytes_accessed=bytes_accessed),
    )(*args)

    # Free row-major unpack + strip padding rows.
    return out_packed.reshape(M_pad, O)[:M].reshape(B, L, O)


def _reference(x, params):
    """Pure-JAX reference of the eval-mode PyTorch forward."""
    eps = 1e-5
    h = jnp.einsum("ble,he->blh", x, params["w1"]) + params["b1"]
    h = jnp.maximum(h, 0.0)
    inv_std = 1.0 / jnp.sqrt(params["bn_var"] + eps)
    h = (h - params["bn_mean"][None, :, None]) * inv_std[None, :, None]
    h = h * params["bn_w"][None, :, None] + params["bn_b"][None, :, None]
    y = jnp.einsum("blh,oh->blo", h, params["w2"]) + params["b2"]
    return y


if __name__ == "__main__":
    # Small shapes consistent with the module: embedding=32, hidden=32, output=16
    B, L, E, H, O = 4, SEQ_LEN, 32, 32, 16

    key = jax.random.PRNGKey(0)
    keys = jax.random.split(key, 10)
    x = jax.random.normal(keys[0], (B, L, E), dtype=jnp.float32)

    # Deterministic parameters (shapes match nn.Linear / nn.BatchNorm1d(20)).
    params = {
        "w1": jax.random.normal(keys[1], (H, E), dtype=jnp.float32) * 0.1,
        "b1": jax.random.normal(keys[2], (H,), dtype=jnp.float32) * 0.1,
        "w2": jax.random.normal(keys[3], (O, H), dtype=jnp.float32) * 0.1,
        "b2": jax.random.normal(keys[4], (O,), dtype=jnp.float32) * 0.1,
        "bn_w": jax.random.normal(keys[5], (L,), dtype=jnp.float32) * 0.1 + 1.0,
        "bn_b": jax.random.normal(keys[6], (L,), dtype=jnp.float32) * 0.1,
        "bn_mean": jax.random.normal(keys[7], (L,), dtype=jnp.float32) * 0.1,
        "bn_var": jax.random.uniform(keys[8], (L,), dtype=jnp.float32,
                                     minval=0.5, maxval=1.5),
    }
    # NOTE: dropout(p) is identity in eval mode, so it contributes no compute.
    # TODO(synk): training-mode stochastic dropout / batch-statistics BN not implemented.

    ref = _reference(x, params)

    # f32 path (single grid step: M = 80 rows -> one packed block).
    out = jax.block_until_ready(self_attention_forward_net_aligned(x, params))
    assert out.shape == (B, L, O)
    assert jnp.allclose(out, ref, atol=1e-4, rtol=1e-4), \
        float(jnp.max(jnp.abs(out - ref)))

    # bf16-matmul path (f32 accumulation); looser tolerance for bf16 inputs.
    out_bf16 = jax.block_until_ready(
        self_attention_forward_net_aligned(x, params, matmul_dtype=jnp.bfloat16))
    assert jnp.allclose(out_bf16, ref, atol=5e-2, rtol=5e-2), \
        float(jnp.max(jnp.abs(out_bf16 - ref)))

    # Larger batch to exercise the multi-block ("parallel") grid path.
    B2 = 64
    x_big = jax.random.normal(keys[9], (B2, L, E), dtype=jnp.float32)
    out_big = jax.block_until_ready(
        self_attention_forward_net_aligned(x_big, params))
    ref_big = _reference(x_big, params)
    assert out_big.shape == (B2, L, O)
    assert jnp.allclose(out_big, ref_big, atol=1e-4, rtol=1e-4), \
        float(jnp.max(jnp.abs(out_big - ref_big)))

    print("KERNEL_OK")
</pallas_src>

<mosaic_0001>
module attributes {stable_mosaic.version = 11 : i64} {
  func.func @_fused_kernel(%arg0: i32, %arg1: memref<10x256xf32, #tpu.memory_space<vmem>>, %arg2: memref<256x256xf32, #tpu.memory_space<vmem>>, %arg3: memref<1x256xf32, #tpu.memory_space<vmem>>, %arg4: memref<10x256xf32, #tpu.memory_space<vmem>>, %arg5: memref<10x256xf32, #tpu.memory_space<vmem>>, %arg6: memref<256x128xf32, #tpu.memory_space<vmem>>, %arg7: memref<1x128xf32, #tpu.memory_space<vmem>>, %arg8: memref<10x128xf32, #tpu.memory_space<vmem>>) attributes {dimension_semantics = [#tpu.dimension_semantics<parallel>], iteration_bounds = array<i64: 1>, scalar_prefetch = 0 : i64, scratch_operands = 0 : i64, tpu.core_type = #tpu.core_type<tc>, window_params = [{transform_indices = @transform_0, window_bounds = array<i64: 10, 256>}, {pipeline_mode = #tpu.pipeline_mode<synchronous>, transform_indices = @transform_1, window_bounds = array<i64: 256, 256>}, {pipeline_mode = #tpu.pipeline_mode<synchronous>, transform_indices = @transform_2, window_bounds = array<i64: 1, 256>}, {pipeline_mode = #tpu.pipeline_mode<synchronous>, transform_indices = @transform_3, window_bounds = array<i64: 10, 256>}, {pipeline_mode = #tpu.pipeline_mode<synchronous>, transform_indices = @transform_4, window_bounds = array<i64: 10, 256>}, {pipeline_mode = #tpu.pipeline_mode<synchronous>, transform_indices = @transform_5, window_bounds = array<i64: 256, 128>}, {pipeline_mode = #tpu.pipeline_mode<synchronous>, transform_indices = @transform_6, window_bounds = array<i64: 1, 128>}, {transform_indices = @transform_7, window_bounds = array<i64: 10, 128>}]} {
    %c0 = arith.constant 0 : index
    %c0_0 = arith.constant 0 : index
    %0 = vector.load %arg1[%c0, %c0_0] : memref<10x256xf32, #tpu.memory_space<vmem>>, vector<10x256xf32>
    %c0_1 = arith.constant 0 : index
    %c0_2 = arith.constant 0 : index
    %1 = vector.load %arg2[%c0_1, %c0_2] : memref<256x256xf32, #tpu.memory_space<vmem>>, vector<256x256xf32>
    %cst = arith.constant dense<0.000000e+00> : vector<10x256xf32>
    %2 = tpu.matmul %0, %1, %cst {dimension_numbers = #tpu.dot_dimension_numbers<[1], [0], [0], [1], [0, 0, 1, 1], [], []>} : vector<10x256xf32>, vector<256x256xf32>, vector<10x256xf32> -> vector<10x256xf32>
    %c0_3 = arith.constant 0 : index
    %c0_4 = arith.constant 0 : index
    %3 = vector.load %arg3[%c0_3, %c0_4] : memref<1x256xf32, #tpu.memory_space<vmem>>, vector<1x256xf32>
    %4 = vector.broadcast %3 : vector<1x256xf32> to vector<10x256xf32>
    %5 = arith.addf %2, %4 : vector<10x256xf32>
    %cst_5 = arith.constant 0.000000e+00 : f32
    %6 = vector.broadcast %cst_5 : f32 to vector<10x256xf32>
    %7 = arith.maximumf %5, %6 : vector<10x256xf32>
    %c0_6 = arith.constant 0 : index
    %c0_7 = arith.constant 0 : index
    %8 = vector.load %arg4[%c0_6, %c0_7] : memref<10x256xf32, #tpu.memory_space<vmem>>, vector<10x256xf32>
    %9 = arith.mulf %7, %8 : vector<10x256xf32>
    %c0_8 = arith.constant 0 : index
    %c0_9 = arith.constant 0 : index
    %10 = vector.load %arg5[%c0_8, %c0_9] : memref<10x256xf32, #tpu.memory_space<vmem>>, vector<10x256xf32>
    %11 = arith.addf %9, %10 : vector<10x256xf32>
    %c0_10 = arith.constant 0 : index
    %c0_11 = arith.constant 0 : index
    %12 = vector.load %arg6[%c0_10, %c0_11] : memref<256x128xf32, #tpu.memory_space<vmem>>, vector<256x128xf32>
    %cst_12 = arith.constant dense<0.000000e+00> : vector<10x128xf32>
    %13 = tpu.matmul %11, %12, %cst_12 {dimension_numbers = #tpu.dot_dimension_numbers<[1], [0], [0], [1], [0, 0, 1, 1], [], []>} : vector<10x256xf32>, vector<256x128xf32>, vector<10x128xf32> -> vector<10x128xf32>
    %c0_13 = arith.constant 0 : index
    %c0_14 = arith.constant 0 : index
    %14 = vector.load %arg7[%c0_13, %c0_14] : memref<1x128xf32, #tpu.memory_space<vmem>>, vector<1x128xf32>
    %15 = vector.broadcast %14 : vector<1x128xf32> to vector<10x128xf32>
    %16 = arith.addf %13, %15 : vector<10x128xf32>
    %c0_15 = arith.constant 0 : index
    %c0_16 = arith.constant 0 : index
    %17 = vector.load %arg8[%c0_15, %c0_16] : memref<10x128xf32, #tpu.memory_space<vmem>>, vector<10x128xf32>
    tpu.vector_store %arg8[%c0_15, %c0_16], %16 {strides = array<i32>} : memref<10x128xf32, #tpu.memory_space<vmem>>, vector<10x128xf32>,
    return
  }
  func.func @transform_0(%arg0: i32) -> (i32, i32) {
    %c0_i32 = arith.constant 0 : i32
    %c0_i32_0 = arith.constant 0 : i32
    return %arg0, %c0_i32 : i32, i32
  }
  func.func @transform_1(%arg0: i32) -> (i32, i32) {
    %c0_i32 = arith.constant 0 : i32
    %c0_i32_0 = arith.constant 0 : i32
    %c0_i32_1 = arith.constant 0 : i32
    return %c0_i32, %c0_i32_0 : i32, i32
  }
  func.func @transform_2(%arg0: i32) -> (i32, i32) {
    %c0_i32 = arith.constant 0 : i32
    %c0_i32_0 = arith.constant 0 : i32
    %c0_i32_1 = arith.constant 0 : i32
    return %c0_i32, %c0_i32_0 : i32, i32
  }
  func.func @transform_3(%arg0: i32) -> (i32, i32) {
    %c0_i32 = arith.constant 0 : i32
    %c0_i32_0 = arith.constant 0 : i32
    %c0_i32_1 = arith.constant 0 : i32
    return %c0_i32, %c0_i32_0 : i32, i32
  }
  func.func @transform_4(%arg0: i32) -> (i32, i32) {
    %c0_i32 = arith.constant 0 : i32
    %c0_i32_0 = arith.constant 0 : i32
    %c0_i32_1 = arith.constant 0 : i32
    return %c0_i32, %c0_i32_0 : i32, i32
  }
  func.func @transform_5(%arg0: i32) -> (i32, i32) {
    %c0_i32 = arith.constant 0 : i32
    %c0_i32_0 = arith.constant 0 : i32
    %c0_i32_1 = arith.constant 0 : i32
    return %c0_i32, %c0_i32_0 : i32, i32
  }
  func.func @transform_6(%arg0: i32) -> (i32, i32) {
    %c0_i32 = arith.constant 0 : i32
    %c0_i32_0 = arith.constant 0 : i32
    %c0_i32_1 = arith.constant 0 : i32
    return %c0_i32, %c0_i32_0 : i32, i32
  }
  func.func @transform_7(%arg0: i32) -> (i32, i32) {
    %c0_i32 = arith.constant 0 : i32
    %c0_i32_0 = arith.constant 0 : i32
    return %arg0, %c0_i32 : i32, i32
  }
}

</mosaic_0001>

<llo_original>
// kernel: tpu_custom_call.1
$region0: #{tpu_custom_call.1}
  #allocation0 [shape = 'u32[]', space=smem, size = 0x4, offset = 0x4, fixed_abs, tag = 'smem constant byte address 0x4 - core index']
  #allocation1 [shape = 'u32[72,128]{1,0:T(1,128)}', space=vmem, size = 0x9000, scoped, tag = 'internal scratch']
  %s0 = inlined_call_operand.hbm [shape: f32[10,256], index: 0, kind: input, shape index: {}]
  %s1 = inlined_call_operand.hbm [shape: f32[256,256], index: 1, kind: input, shape index: {}]
  %s2 = inlined_call_operand.hbm [shape: f32[1,256], index: 2, kind: input, shape index: {}]
  %s3 = inlined_call_operand.hbm [shape: f32[10,256], index: 3, kind: input, shape index: {}]
  %s4 = inlined_call_operand.hbm [shape: f32[10,256], index: 4, kind: input, shape index: {}]
  %s5 = inlined_call_operand.hbm [shape: f32[256,128], index: 5, kind: input, shape index: {}]
  %s6 = inlined_call_operand.vmem [shape: f32[1,128], index: 6, kind: input, shape index: {}]
  %s7 = inlined_call_operand.hbm [shape: f32[10,128], index: 7, kind: output, shape index: {}]
  %s8 = sld [smem:[#allocation0]]
  $region62: #{tpu_custom_call.1} parent=0
    _
  %s10 = ssub.s32 1, %s8
  %s11 = scalar_select 0, %s10, %s8
  $region1: #{tpu_custom_call.1} parent=0
    #allocation2 [shape = 'u8[16384]{0}', space=vmem, size = 0x4000, scoped, tag = 'input window, operand 0, single buffered']
    #allocation3 [shape = 's32[1]{0}', space=sflag, size = 0x4, scoped, tag = 'scoped memory for tpu_custom_call.1']
    #allocation4 [shape = 's32[1]{0}', space=sflag, size = 0x4, scoped, tag = 'scoped memory for tpu_custom_call.1']
    #allocation5 [shape = 'u8[262144]{0}', space=vmem, size = 0x40000, scoped, tag = 'input window, operand 1, single buffered']
    #allocation6 [shape = 's32[1]{0}', space=sflag, size = 0x4, scoped, tag = 'scoped memory for tpu_custom_call.1']
    #allocation7 [shape = 'u8[1024]{0}', space=vmem, size = 0x400, scoped, tag = 'input window, operand 2, single buffered']
    #allocation8 [shape = 'u8[16384]{0}', space=vmem, size = 0x4000, scoped, tag = 'input window, operand 3, single buffered']
    #allocation9 [shape = 's32[1]{0}', space=sflag, size = 0x4, scoped, tag = 'scoped memory for tpu_custom_call.1']
    #allocation10 [shape = 'u8[16384]{0}', space=vmem, size = 0x4000, scoped, tag = 'input window, operand 4, single buffered']
    #allocation11 [shape = 'u8[131072]{0}', space=vmem, size = 0x20000, scoped, tag = 'input window, operand 5, single buffered']
    #allocation12 [shape = 's32[1]{0}', space=sflag, size = 0x4, scoped, tag = 'scoped memory for tpu_custom_call.1']
    #allocation13 [shape = 'u8[8192]{0}', space=vmem, size = 0x2000, scoped, tag = 'output window, operand 0, single buffered']
    %12 = vsyncpa [#allocation3], 0
    %13 = vsyncpa [#allocation6], 0
    %14 = vsyncpa [#allocation9], 0
    %15 = vsyncpa [#allocation12], 0
    %16 = vsyncpa [#allocation4], 0
    // Predicated region
    $region2: #{tpu_custom_call.1} parent=1 // pred_check
      _
    $region3: #{tpu_custom_call.1} parent=1 // pred_check_branch
      %18 = sbr.rel (0) target = $region5
    $region4: #{tpu_custom_call.1} parent=1 // pred_region
      %20 = vsyncadd [#allocation3], 0
      %s21 = sshll.u32 %s0, 4
      %s22 = int_to_ptr.hbm [resolvable:$true] %s21
      %s23 = sshll.u32 [#allocation2], 4
      %s24 = int_to_ptr.vmem [resolvable:$true] %s23
      %29 = dma.hbm_to_vmem [thread:$0]  %s22, 512, %s24, [#allocation3], 256, 256, 16
    $region5: #{tpu_custom_call.1} parent=1 // pred_fallthru
      _
    // Predicated region
    $region6: #{tpu_custom_call.1} parent=1 // pred_check
      _
    $region7: #{tpu_custom_call.1} parent=1 // pred_check_branch
      %31 = sbr.rel (0) target = $region9
    $region8: #{tpu_custom_call.1} parent=1 // pred_region
      %33 = vsyncadd [#allocation6], 0
      %s34 = sshll.u32 %s1, 4
      %s35 = int_to_ptr.hbm [resolvable:$true] %s34
      %s36 = sshll.u32 [#allocation5], 4
      %s37 = int_to_ptr.vmem [resolvable:$true] %s36
      %42 = dma.hbm_to_vmem [thread:$0]  %s35, 8192, %s37, [#allocation6], 256, 256, 16
    $region9: #{tpu_custom_call.1} parent=1 // pred_fallthru
      _
    // Predicated region
    $region10: #{tpu_custom_call.1} parent=1 // pred_check
      _
    $region11: #{tpu_custom_call.1} parent=1 // pred_check_branch
      %44 = sbr.rel (0) target = $region13
    $region12: #{tpu_custom_call.1} parent=1 // pred_region
      %46 = vsyncadd [#allocation6], 0
      %s48 = sshll.u32 %s2, 4
      %s49 = int_to_ptr.hbm [resolvable:$true] %s48
      %s50 = sshll.u32 [#allocation7], 4
      %s51 = int_to_ptr.vmem [resolvable:$true] %s50
      %53 = dma.hbm_to_vmem [thread:$0]  %s49, 32, %s51, [#allocation6]
    $region13: #{tpu_custom_call.1} parent=1 // pred_fallthru
      _
    // Predicated region
    $region14: #{tpu_custom_call.1} parent=1 // pred_check
      _
    $region15: #{tpu_custom_call.1} parent=1 // pred_check_branch
      %55 = sbr.rel (0) target = $region17
    $region16: #{tpu_custom_call.1} parent=1 // pred_region
      %57 = vsyncadd [#allocation9], 0
      %s58 = sshll.u32 %s3, 4
      %s59 = int_to_ptr.hbm [resolvable:$true] %s58
      %s60 = sshll.u32 [#allocation8], 4
      %s61 = int_to_ptr.vmem [resolvable:$true] %s60
      %66 = dma.hbm_to_vmem [thread:$0]  %s59, 512, %s61, [#allocation9], 256, 256, 16
    $region17: #{tpu_custom_call.1} parent=1 // pred_fallthru
      _
    // Predicated region
    $region18: #{tpu_custom_call.1} parent=1 // pred_check
      _
    $region19: #{tpu_custom_call.1} parent=1 // pred_check_branch
      %68 = sbr.rel (0) target = $region21
    $region20: #{tpu_custom_call.1} parent=1 // pred_region
      %70 = vsyncadd [#allocation9], 0
      %s71 = sshll.u32 %s4, 4
      %s72 = int_to_ptr.hbm [resolvable:$true] %s71
      %s73 = sshll.u32 [#allocation10], 4
      %s74 = int_to_ptr.vmem [resolvable:$true] %s73
      %79 = dma.hbm_to_vmem [thread:$0]  %s72, 512, %s74, [#allocation9], 256, 256, 16
    $region21: #{tpu_custom_call.1} parent=1 // pred_fallthru
      _
    // Predicated region
    $region22: #{tpu_custom_call.1} parent=1 // pred_check
      _
    $region23: #{tpu_custom_call.1} parent=1 // pred_check_branch
      %81 = sbr.rel (0) target = $region25
    $region24: #{tpu_custom_call.1} parent=1 // pred_region
      %83 = vsyncadd [#allocation12], 0
      %s84 = sshll.u32 %s5, 4
      %s85 = int_to_ptr.hbm [resolvable:$true] %s84
      %s86 = sshll.u32 [#allocation11], 4
      %s87 = int_to_ptr.vmem [resolvable:$true] %s86
      %92 = dma.hbm_to_vmem [thread:$0]  %s85, 4096, %s87, [#allocation12], 128, 128, 8
    $region25: #{tpu_custom_call.1} parent=1 // pred_fallthru
      _
    // Predicated region
    $region26: #{tpu_custom_call.1} parent=1 // pred_check
      _
    $region27: #{tpu_custom_call.1} parent=1 // pred_check_branch
      %94 = sbr.rel (0) target = $region29
    $region28: #{tpu_custom_call.1} parent=1 // pred_region
      _
    $region29: #{tpu_custom_call.1} parent=1 // pred_fallthru
      _
    // Predicated region
    $region30: #{tpu_custom_call.1} parent=1 // pred_check
      _
    $region31: #{tpu_custom_call.1} parent=1 // pred_check_branch
      %96 = sbr.rel (0) target = $region33
    $region32: #{tpu_custom_call.1} parent=1 // pred_region
      %98 = dma.done [#allocation3], 512
    $region33: #{tpu_custom_call.1} parent=1 // pred_fallthru
      _
    // Predicated region
    $region34: #{tpu_custom_call.1} parent=1 // pred_check
      _
    $region35: #{tpu_custom_call.1} parent=1 // pred_check_branch
      %100 = sbr.rel (0) target = $region37
    $region36: #{tpu_custom_call.1} parent=1 // pred_region
      %102 = dma.done [#allocation6], 8192
    $region37: #{tpu_custom_call.1} parent=1 // pred_fallthru
      _
    // Predicated region
    $region38: #{tpu_custom_call.1} parent=1 // pred_check
      _
    $region39: #{tpu_custom_call.1} parent=1 // pred_check_branch
      %104 = sbr.rel (0) target = $region41
    $region40: #{tpu_custom_call.1} parent=1 // pred_region
      %106 = dma.done [#allocation6], 32
    $region41: #{tpu_custom_call.1} parent=1 // pred_fallthru
      _
    // Predicated region
    $region42: #{tpu_custom_call.1} parent=1 // pred_check
      _
    $region43: #{tpu_custom_call.1} parent=1 // pred_check_branch
      %108 = sbr.rel (0) target = $region45
    $region44: #{tpu_custom_call.1} parent=1 // pred_region
      %110 = dma.done [#allocation9], 512
    $region45: #{tpu_custom_call.1} parent=1 // pred_fallthru
      _
    // Predicated region
    $region46: #{tpu_custom_call.1} parent=1 // pred_check
      _
    $region47: #{tpu_custom_call.1} parent=1 // pred_check_branch
      %112 = sbr.rel (0) target = $region49
    $region48: #{tpu_custom_call.1} parent=1 // pred_region
      %114 = dma.done [#allocation9], 512
    $region49: #{tpu_custom_call.1} parent=1 // pred_fallthru
      _
    // Predicated region
    $region50: #{tpu_custom_call.1} parent=1 // pred_check
      _
    $region51: #{tpu_custom_call.1} parent=1 // pred_check_branch
      %116 = sbr.rel (0) target = $region53
    $region52: #{tpu_custom_call.1} parent=1 // pred_region
      %118 = dma.done [#allocation12], 4096
    $region53: #{tpu_custom_call.1} parent=1 // pred_fallthru
      _
    %v119 = vld [vmem:[#allocation2] sm:$0xff]
    %v120 = vld [vmem:[#allocation2 + $0x8] sm:$0xff]
    %v121 = vld [vmem:[#allocation2 + $0x10] sm:$0x3]
    %v122 = vld [vmem:[#allocation2 + $0x18] sm:$0x3]
    %v123 = vld [vmem:[#allocation5] sm:$0xff]
    %v124 = vld [vmem:[#allocation5 + $0x8] sm:$0xff]
    %v125 = vld [vmem:[#allocation5 + $0x10] sm:$0xff]
    %v126 = vld [vmem:[#allocation5 + $0x18] sm:$0xff]
    %v127 = vld [vmem:[#allocation5 + $0x20] sm:$0xff]
    %v128 = vld [vmem:[#allocation5 + $0x28] sm:$0xff]
    %v129 = vld [vmem:[#allocation5 + $0x30] sm:$0xff]
    %v130 = vld [vmem:[#allocation5 + $0x38] sm:$0xff]
    %v131 = vld [vmem:[#allocation5 + $0x40] sm:$0xff]
    %v132 = vld [vmem:[#allocation5 + $0x48] sm:$0xff]
    %v133 = vld [vmem:[#allocation5 + $0x50] sm:$0xff]
    %v134 = vld [vmem:[#allocation5 + $0x58] sm:$0xff]
    %v135 = vld [vmem:[#allocation5 + $0x60] sm:$0xff]
    %v136 = vld [vmem:[#allocation5 + $0x68] sm:$0xff]
    %v137 = vld [vmem:[#allocation5 + $0x70] sm:$0xff]
    %v138 = vld [vmem:[#allocation5 + $0x78] sm:$0xff]
    %v139 = vld [vmem:[#allocation5 + $0x80] sm:$0xff]
    %v140 = vld [vmem:[#allocation5 + $0x88] sm:$0xff]
    %v141 = vld [vmem:[#allocation5 + $0x90] sm:$0xff]
    %v142 = vld [vmem:[#allocation5 + $0x98] sm:$0xff]
    %v143 = vld [vmem:[#allocation5 + $0xa0] sm:$0xff]
    %v144 = vld [vmem:[#allocation5 + $0xa8] sm:$0xff]
    %v145 = vld [vmem:[#allocation5 + $0xb0] sm:$0xff]
    %v146 = vld [vmem:[#allocation5 + $0xb8] sm:$0xff]
    %v147 = vld [vmem:[#allocation5 + $0xc0] sm:$0xff]
    %v148 = vld [vmem:[#allocation5 + $0xc8] sm:$0xff]
    %v149 = vld [vmem:[#allocation5 + $0xd0] sm:$0xff]
    %v150 = vld [vmem:[#allocation5 + $0xd8] sm:$0xff]
    %v151 = vld [vmem:[#allocation5 + $0xe0] sm:$0xff]
    %v152 = vld [vmem:[#allocation5 + $0xe8] sm:$0xff]
    %v153 = vld [vmem:[#allocation5 + $0xf0] sm:$0xff]
    %v154 = vld [vmem:[#allocation5 + $0xf8] sm:$0xff]
    %v155 = vld [vmem:[#allocation5 + $0x100] sm:$0xff]
    %v156 = vld [vmem:[#allocation5 + $0x108] sm:$0xff]
    %v157 = vld [vmem:[#allocation5 + $0x110] sm:$0xff]
    %v158 = vld [vmem:[#allocation5 + $0x118] sm:$0xff]
    %v159 = vld [vmem:[#allocation5 + $0x120] sm:$0xff]
    %v160 = vld [vmem:[#allocation5 + $0x128] sm:$0xff]
    %v161 = vld [vmem:[#allocation5 + $0x130] sm:$0xff]
    %v162 = vld [vmem:[#allocation5 + $0x138] sm:$0xff]
    %v163 = vld [vmem:[#allocation5 + $0x140] sm:$0xff]
    %v164 = vld [vmem:[#allocation5 + $0x148] sm:$0xff]
    %v165 = vld [vmem:[#allocation5 + $0x150] sm:$0xff]
    %v166 = vld [vmem:[#allocation5 + $0x158] sm:$0xff]
    %v167 = vld [vmem:[#allocation5 + $0x160] sm:$0xff]
    %v168 = vld [vmem:[#allocation5 + $0x168] sm:$0xff]
    %v169 = vld [vmem:[#allocation5 + $0x170] sm:$0xff]
    %v170 = vld [vmem:[#allocation5 + $0x178] sm:$0xff]
    %v171 = vld [vmem:[#allocation5 + $0x180] sm:$0xff]
    %v172 = vld [vmem:[#allocation5 + $0x188] sm:$0xff]
    %v173 = vld [vmem:[#allocation5 + $0x190] sm:$0xff]
    %v174 = vld [vmem:[#allocation5 + $0x198] sm:$0xff]
    %v175 = vld [vmem:[#allocation5 + $0x1a0] sm:$0xff]
    %v176 = vld [vmem:[#allocation5 + $0x1a8] sm:$0xff]
    %v177 = vld [vmem:[#allocation5 + $0x1b0] sm:$0xff]
    %v178 = vld [vmem:[#allocation5 + $0x1b8] sm:$0xff]
    %v179 = vld [vmem:[#allocation5 + $0x1c0] sm:$0xff]
    %v180 = vld [vmem:[#allocation5 + $0x1c8] sm:$0xff]
    %v181 = vld [vmem:[#allocation5 + $0x1d0] sm:$0xff]
    %v182 = vld [vmem:[#allocation5 + $0x1d8] sm:$0xff]
    %v183 = vld [vmem:[#allocation5 + $0x1e0] sm:$0xff]
    %v184 = vld [vmem:[#allocation5 + $0x1e8] sm:$0xff]
    %v185 = vld [vmem:[#allocation5 + $0x1f0] sm:$0xff]
    %v186 = vld [vmem:[#allocation5 + $0x1f8] sm:$0xff]
    %v187 = vld [vmem:[#allocation7] sm:$0x3]
    %v189 = vperm.slane %v187, 0
    %v190 = vperm.slane %v187, 1
    %193 = vmatpush.msra.mxu0 %v153
    %194 = vmatpush.msra.mxu0 %v151
    %195 = vmatpush.msra.mxu0 %v149
    %196 = vmatpush.msra.mxu0 %v147
    %197 = vmatpush.msra.mxu0 %v145
    %198 = vmatpush.msra.mxu0 %v143
    %199 = vmatpush.msra.mxu0 %v141
    %200 = vmatpush.msra.mxu0 %v139
    %201 = vmatpush.msra.mxu0 %v137
    %202 = vmatpush.msra.mxu0 %v135
    %203 = vmatpush.msra.mxu0 %v133
    %204 = vmatpush.msra.mxu0 %v131
    %205 = vmatpush.msra.mxu0 %v129
    %206 = vmatpush.msra.mxu0 %v127
    %207 = vmatpush.msra.mxu0 %v125
    %208 = vmatpush.msra.mxu0 %v123
    %209 = vmatmul.f32.gmra.mxu0 %v119
    %v210 = vpop.f32.mrf.mxu0
    %v211 = vadd.f32 %v189, %v210
    %212 = vmatmul.f32.gmra.mxu0 %v121
    %v213 = vpop.f32.mrf.mxu0
    %v214 = vadd.f32 %v189, %v213
    %215 = vdwg.mxu0
    %216 = vmatpush.msra.mxu0 %v185
    %217 = vmatpush.msra.mxu0 %v183
    %218 = vmatpush.msra.mxu0 %v181
    %219 = vmatpush.msra.mxu0 %v179
    %220 = vmatpush.msra.mxu0 %v177
    %221 = vmatpush.msra.mxu0 %v175
    %222 = vmatpush.msra.mxu0 %v173
    %223 = vmatpush.msra.mxu0 %v171
    %224 = vmatpush.msra.mxu0 %v169
    %225 = vmatpush.msra.mxu0 %v167
    %226 = vmatpush.msra.mxu0 %v165
    %227 = vmatpush.msra.mxu0 %v163
    %228 = vmatpush.msra.mxu0 %v161
    %229 = vmatpush.msra.mxu0 %v159
    %230 = vmatpush.msra.mxu0 %v157
    %231 = vmatpush.msra.mxu0 %v155
    %232 = vmatmul.f32.gmra.mxu0 %v120
    %v233 = vpop.f32.mrf.mxu0
    %v234 = vadd.f32 %v211, %v233
    %235 = vmatmul.f32.gmra.mxu0 %v122
    %v236 = vpop.f32.mrf.mxu0
    %v237 = vadd.f32 %v214, %v236
    %238 = vdwg.mxu0
    %239 = vmatpush.msra.mxu0 %v154
    %240 = vmatpush.msra.mxu0 %v152
    %241 = vmatpush.msra.mxu0 %v150
    %242 = vmatpush.msra.mxu0 %v148
    %243 = vmatpush.msra.mxu0 %v146
    %244 = vmatpush.msra.mxu0 %v144
    %245 = vmatpush.msra.mxu0 %v142
    %246 = vmatpush.msra.mxu0 %v140
    %247 = vmatpush.msra.mxu0 %v138
    %248 = vmatpush.msra.mxu0 %v136
    %249 = vmatpush.msra.mxu0 %v134
    %250 = vmatpush.msra.mxu0 %v132
    %251 = vmatpush.msra.mxu0 %v130
    %252 = vmatpush.msra.mxu0 %v128
    %253 = vmatpush.msra.mxu0 %v126
    %254 = vmatpush.msra.mxu0 %v124
    %255 = vmatmul.f32.gmra.mxu0 %v119
    %v256 = vpop.f32.mrf.mxu0
    %v257 = vadd.f32 %v190, %v256
    %258 = vmatmul.f32.gmra.mxu0 %v121
    %v259 = vpop.f32.mrf.mxu0
    %v260 = vadd.f32 %v190, %v259
    %261 = vdwg.mxu0
    %262 = vmatpush.msra.mxu0 %v186
    %263 = vmatpush.msra.mxu0 %v184
    %264 = vmatpush.msra.mxu0 %v182
    %265 = vmatpush.msra.mxu0 %v180
    %266 = vmatpush.msra.mxu0 %v178
    %267 = vmatpush.msra.mxu0 %v176
    %268 = vmatpush.msra.mxu0 %v174
    %269 = vmatpush.msra.mxu0 %v172
    %270 = vmatpush.msra.mxu0 %v170
    %271 = vmatpush.msra.mxu0 %v168
    %272 = vmatpush.msra.mxu0 %v166
    %273 = vmatpush.msra.mxu0 %v164
    %274 = vmatpush.msra.mxu0 %v162
    %275 = vmatpush.msra.mxu0 %v160
    %276 = vmatpush.msra.mxu0 %v158
    %277 = vmatpush.msra.mxu0 %v156
    %278 = vmatmul.f32.gmra.mxu0 %v120
    %v279 = vpop.f32.mrf.mxu0
    %v280 = vadd.f32 %v257, %v279
    %281 = vmatmul.f32.gmra.mxu0 %v122
    %v282 = vpop.f32.mrf.mxu0
    %v283 = vadd.f32 %v260, %v282
    %284 = vdwg.mxu0
    %v285 = vmax.f32 %v234, 0.0
    %v286 = vmax.f32 %v280, 0.0
    %v287 = vmax.f32 %v237, 0.0
    %v288 = vmax.f32 %v283, 0.0
    %v289 = vld [vmem:[#allocation8] sm:$0xff]
    %v290 = vld [vmem:[#allocation8 + $0x8] sm:$0xff]
    %v291 = vld [vmem:[#allocation8 + $0x10] sm:$0x3]
    %v292 = vld [vmem:[#allocation8 + $0x18] sm:$0x3]
    %v293 = vmul.f32 %v285, %v289
    %v294 = vmul.f32 %v286, %v290
    %v295 = vmul.f32 %v287, %v291
    %v296 = vmul.f32 %v288, %v292
    %v297 = vld [vmem:[#allocation10] sm:$0xff]
    %v298 = vld [vmem:[#allocation10 + $0x8] sm:$0xff]
    %v299 = vld [vmem:[#allocation10 + $0x10] sm:$0x3]
    %v300 = vld [vmem:[#allocation10 + $0x18] sm:$0x3]
    %v301 = vadd.f32 %v293, %v297
    %v302 = vadd.f32 %v294, %v298
    %v303 = vadd.f32 %v295, %v299
    %v304 = vadd.f32 %v296, %v300
    %v305 = vld [vmem:[#allocation11] sm:$0xff]
    %v306 = vld [vmem:[#allocation11 + $0x8] sm:$0xff]
    %v307 = vld [vmem:[#allocation11 + $0x10] sm:$0xff]
    %v308 = vld [vmem:[#allocation11 + $0x18] sm:$0xff]
    %v309 = vld [vmem:[#allocation11 + $0x20] sm:$0xff]
    %v310 = vld [vmem:[#allocation11 + $0x28] sm:$0xff]
    %v311 = vld [vmem:[#allocation11 + $0x30] sm:$0xff]
    %v312 = vld [vmem:[#allocation11 + $0x38] sm:$0xff]
    %v313 = vld [vmem:[#allocation11 + $0x40] sm:$0xff]
    %v314 = vld [vmem:[#allocation11 + $0x48] sm:$0xff]
    %v315 = vld [vmem:[#allocation11 + $0x50] sm:$0xff]
    %v316 = vld [vmem:[#allocation11 + $0x58] sm:$0xff]
    %v317 = vld [vmem:[#allocation11 + $0x60] sm:$0xff]
    %v318 = vld [vmem:[#allocation11 + $0x68] sm:$0xff]
    %v319 = vld [vmem:[#allocation11 + $0x70] sm:$0xff]
    %v320 = vld [vmem:[#allocation11 + $0x78] sm:$0xff]
    %v321 = vld [vmem:[#allocation11 + $0x80] sm:$0xff]
    %v322 = vld [vmem:[#allocation11 + $0x88] sm:$0xff]
    %v323 = vld [vmem:[#allocation11 + $0x90] sm:$0xff]
    %v324 = vld [vmem:[#allocation11 + $0x98] sm:$0xff]
    %v325 = vld [vmem:[#allocation11 + $0xa0] sm:$0xff]
    %v326 = vld [vmem:[#allocation11 + $0xa8] sm:$0xff]
    %v327 = vld [vmem:[#allocation11 + $0xb0] sm:$0xff]
    %v328 = vld [vmem:[#allocation11 + $0xb8] sm:$0xff]
    %v329 = vld [vmem:[#allocation11 + $0xc0] sm:$0xff]
    %v330 = vld [vmem:[#allocation11 + $0xc8] sm:$0xff]
    %v331 = vld [vmem:[#allocation11 + $0xd0] sm:$0xff]
    %v332 = vld [vmem:[#allocation11 + $0xd8] sm:$0xff]
    %v333 = vld [vmem:[#allocation11 + $0xe0] sm:$0xff]
    %v334 = vld [vmem:[#allocation11 + $0xe8] sm:$0xff]
    %v335 = vld [vmem:[#allocation11 + $0xf0] sm:$0xff]
    %v336 = vld [vmem:[#allocation11 + $0xf8] sm:$0xff]
    %v337 = vld [vmem:[%s6] sm:$0x1]
    %v339 = vperm.slane %v337, 0
    %341 = vmatpush.msra.mxu0 %v320
    %342 = vmatpush.msra.mxu0 %v319
    %343 = vmatpush.msra.mxu0 %v318
    %344 = vmatpush.msra.mxu0 %v317
    %345 = vmatpush.msra.mxu0 %v316
    %346 = vmatpush.msra.mxu0 %v315
    %347 = vmatpush.msra.mxu0 %v314
    %348 = vmatpush.msra.mxu0 %v313
    %349 = vmatpush.msra.mxu0 %v312
    %350 = vmatpush.msra.mxu0 %v311
    %351 = vmatpush.msra.mxu0 %v310
    %352 = vmatpush.msra.mxu0 %v309
    %353 = vmatpush.msra.mxu0 %v308
    %354 = vmatpush.msra.mxu0 %v307
    %355 = vmatpush.msra.mxu0 %v306
    %356 = vmatpush.msra.mxu0 %v305
    %357 = vmatmul.f32.gmra.mxu0 %v301
    %v358 = vpop.f32.mrf.mxu0
    %v359 = vadd.f32 %v339, %v358
    %360 = vmatmul.f32.gmra.mxu0 %v303
    %v361 = vpop.f32.mrf.mxu0
    %v362 = vadd.f32 %v339, %v361
    %363 = vdwg.mxu0
    %364 = vmatpush.msra.mxu0 %v336
    %365 = vmatpush.msra.mxu0 %v335
    %366 = vmatpush.msra.mxu0 %v334
    %367 = vmatpush.msra.mxu0 %v333
    %368 = vmatpush.msra.mxu0 %v332
    %369 = vmatpush.msra.mxu0 %v331
    %370 = vmatpush.msra.mxu0 %v330
    %371 = vmatpush.msra.mxu0 %v329
    %372 = vmatpush.msra.mxu0 %v328
    %373 = vmatpush.msra.mxu0 %v327
    %374 = vmatpush.msra.mxu0 %v326
    %375 = vmatpush.msra.mxu0 %v325
    %376 = vmatpush.msra.mxu0 %v324
    %377 = vmatpush.msra.mxu0 %v323
    %378 = vmatpush.msra.mxu0 %v322
    %379 = vmatpush.msra.mxu0 %v321
    %380 = vmatmul.f32.gmra.mxu0 %v302
    %v381 = vpop.f32.mrf.mxu0
    %v382 = vadd.f32 %v359, %v381
    %383 = vmatmul.f32.gmra.mxu0 %v304
    %v384 = vpop.f32.mrf.mxu0
    %v385 = vadd.f32 %v362, %v384
    %386 = vdwg.mxu0
    %387 = vst [vmem:[#allocation13] sm:$0xff] %v382
    %388 = vst [vmem:[#allocation13 + $0x8] sm:$0x3] %v385
    // Predicated region
    $region54: #{tpu_custom_call.1} parent=1 // pred_check
      _
    $region55: #{tpu_custom_call.1} parent=1 // pred_check_branch
      %390 = sbr.rel (0) target = $region57
    $region56: #{tpu_custom_call.1} parent=1 // pred_region
      %392 = vsyncadd [#allocation4], 0
      %s393 = sshll.u32 [#allocation13], 4
      %s394 = int_to_ptr.vmem [resolvable:$true] %s393
      %s395 = sshll.u32 %s7, 4
      %s396 = int_to_ptr.hbm [resolvable:$true] %s395
      %401 = dma.vmem_to_hbm [thread:$0]  %s394, 256, %s396, [#allocation4], 128, 128, 8
    $region57: #{tpu_custom_call.1} parent=1 // pred_fallthru
      _
    // Predicated region
    $region58: #{tpu_custom_call.1} parent=1 // pred_check
      _
    $region59: #{tpu_custom_call.1} parent=1 // pred_check_branch
      %403 = sbr.rel (0) target = $region61
    $region60: #{tpu_custom_call.1} parent=1 // pred_region
      %405 = dma.done [#allocation4], 256
    $region61: #{tpu_custom_call.1} parent=1 // pred_fallthru
      _
    %406 = vsyncpa [#allocation3], 1
    %407 = vsyncpa [#allocation6], 1
    %408 = vsyncpa [#allocation9], 1
    %409 = vsyncpa [#allocation12], 1
    %410 = vsyncpa [#allocation4], 1

</llo_original>
